<compile_context>
chip_gen: v7x
topology: tpu7x:2x2x1
jax: 0.10.0
libtpu: 0.0.40
codegen_flags: <defaults>
</compile_context>

<pallas_src>
import functools

import jax
import jax.numpy as jnp
from jax.experimental import pallas as pl
from jax.experimental.pallas import tpu as pltpu


def mha_kernel(x_ref, wqkv_ref, wp_ref, bp_ref, o_ref, q_sc, k_sc, v_sc,
               *, num_heads, head_size, q_tile):
    H, hs, tq = num_heads, head_size, q_tile
    T = x_ref.shape[0]
    C = H * hs
    qi = pl.program_id(1)

    # ---- once per batch element: fused QKV projection + head-major cache ----
    @pl.when(qi == 0)
    def _():
        xb = x_ref[...].astype(jnp.bfloat16)                         # (T, C)
        qkv = jnp.dot(xb, wqkv_ref[...],
                      preferred_element_type=jnp.float32)            # (T, 3C) f32
        # Head split happens once per batch element (amortized over all query
        # tiles), so the per-step loop below has no lane slicing / concat.
        for h in range(H):                                           # static loop
            lo = h * hs
            q_sc[h] = qkv[:, lo:lo + hs].astype(jnp.bfloat16)
            k_sc[h] = qkv[:, C + lo:C + lo + hs].astype(jnp.bfloat16)
            v_sc[h] = qkv[:, 2 * C + lo:2 * C + lo + hs].astype(jnp.bfloat16)

    # ---- per query tile: causal attention, batched over heads ----------------
    qs = pl.multiple_of(qi * tq, tq)
    if tq == T:                      # static Python branch
        q = q_sc[...]                                                # (H, tq, hs)
    else:
        q = q_sc[:, pl.ds(qs, tq), :]                                # (H, tq, hs)
    k = k_sc[...]                                                    # (H, T, hs)
    v = v_sc[...]                                                    # (H, T, hs)

    s = jnp.einsum('hqd,hkd->hqk', q, k,
                   preferred_element_type=jnp.float32)               # (H, tq, T)
    s = s * (1.0 / (hs ** 0.5))

    # Causal mask with absolute row offsets (2D iota required on TPU).
    row = qs + jax.lax.broadcasted_iota(jnp.int32, (tq, T), 0)
    col = jax.lax.broadcasted_iota(jnp.int32, (tq, T), 1)
    s = jnp.where((row >= col)[None, :, :], s, -1e30)

    # Numerically stable softmax in f32.
    s = s - jnp.max(s, axis=-1, keepdims=True)
    p = jnp.exp(s)
    p = p * pl.reciprocal(jnp.sum(p, axis=-1, keepdims=True), approx=True)

    o_h = jnp.einsum('hqk,hkd->hqd', p.astype(jnp.bfloat16), v,
                     preferred_element_type=jnp.float32)             # (H, tq, hs)

    # Output projection folded per head and accumulated over heads (no concat).
    part = jnp.einsum('hqd,hdc->hqc', o_h.astype(jnp.bfloat16), wp_ref[...],
                      preferred_element_type=jnp.float32)            # (H, tq, C)
    out = jnp.sum(part, axis=0) + bp_ref[...]                        # (tq, C)
    o_ref[...] = out.astype(o_ref.dtype)


def multi_head_attention(x, wq, wk, wv, wp, bp, *, num_heads):
    B, T, C = x.shape
    assert C % num_heads == 0
    hs = C // num_heads

    # Query-tile size: 128 rows when the sequence splits evenly, else whole T.
    tq = 128 if (T > 128 and T % 128 == 0) else T
    nq = T // tq

    # Pre-transpose once and fuse the QKV weights (PyTorch Linear: y = x @ W.T);
    # cast to bf16 for the MXU (f32 accumulation happens in-kernel).
    wqkv_t = jnp.concatenate([wq.T, wk.T, wv.T], axis=1).astype(jnp.bfloat16)  # (C, 3C)
    wp_heads = wp.T.reshape(num_heads, hs, C).astype(jnp.bfloat16)             # (H, hs, C)
    bp2 = jnp.asarray(bp, jnp.float32).reshape(1, C)

    kernel = functools.partial(mha_kernel, num_heads=num_heads, head_size=hs,
                               q_tile=tq)

    return pl.pallas_call(
        kernel,
        out_shape=jax.ShapeDtypeStruct((B, T, C), x.dtype),
        grid_spec=pltpu.PrefetchScalarGridSpec(
            num_scalar_prefetch=0,
            grid=(B, nq),
            in_specs=[
                pl.BlockSpec((None, T, C), lambda b, qi: (b, 0, 0)),        # x (per batch)
                pl.BlockSpec((C, 3 * C), lambda b, qi: (0, 0)),             # fused Wqkv^T
                pl.BlockSpec((num_heads, hs, C), lambda b, qi: (0, 0, 0)),  # Wp^T per head
                pl.BlockSpec((1, C), lambda b, qi: (0, 0)),                 # proj bias
            ],
            out_specs=pl.BlockSpec((None, tq, C), lambda b, qi: (b, qi, 0)),
            scratch_shapes=[
                pltpu.VMEM((num_heads, T, hs), jnp.bfloat16),   # Q cache (head-major)
                pltpu.VMEM((num_heads, T, hs), jnp.bfloat16),   # K cache
                pltpu.VMEM((num_heads, T, hs), jnp.bfloat16),   # V cache
            ],
        ),
        # Batch axis is parallel (megacore); q-tile axis is arbitrary because the
        # QKV scratch cache is computed at qi == 0 and reused across the tiles.
        # NOTE: for production C/T, also set vmem_limit_bytes in CompilerParams.
        compiler_params=pltpu.CompilerParams(
            dimension_semantics=("parallel", "arbitrary")),
    )(x, wqkv_t, wp_heads, bp2)


def mha_reference(x, wq, wk, wv, wp, bp, *, num_heads):
    """Plain-JAX f32 reference mirroring the PyTorch forward (eval mode)."""
    B, T, C = x.shape
    hs = C // num_heads
    q = (x @ wq.T).reshape(B, T, num_heads, hs).transpose(0, 2, 1, 3)
    k = (x @ wk.T).reshape(B, T, num_heads, hs).transpose(0, 2, 1, 3)
    v = (x @ wv.T).reshape(B, T, num_heads, hs).transpose(0, 2, 1, 3)
    att = jnp.einsum("bhqd,bhkd->bhqk", q, k) * (1.0 / hs ** 0.5)
    mask = jnp.tril(jnp.ones((T, T), bool))
    att = jnp.where(mask[None, None], att, -jnp.inf)
    att = jax.nn.softmax(att, axis=-1)
    out = jnp.einsum("bhqk,bhkd->bhqd", att, v)
    out = out.transpose(0, 2, 1, 3).reshape(B, T, C)
    return out @ wp.T + bp


if __name__ == "__main__":
    B, T, C = 2, 8, 32
    num_heads = 4

    key = jax.random.PRNGKey(0)
    kx, kq, kk, kv, kp, kb = jax.random.split(key, 6)

    x = jax.random.normal(kx, (B, T, C), jnp.float32)
    w_scale = 1.0 / (C ** 0.5)
    wq = jax.random.normal(kq, (C, C), jnp.float32) * w_scale
    wk = jax.random.normal(kk, (C, C), jnp.float32) * w_scale
    wv = jax.random.normal(kv, (C, C), jnp.float32) * w_scale
    wp = jax.random.normal(kp, (C, C), jnp.float32) * w_scale
    bp = jax.random.normal(kb, (C,), jnp.float32) * w_scale

    out = multi_head_attention(x, wq, wk, wv, wp, bp, num_heads=num_heads)
    out = jax.block_until_ready(out)

    ref = mha_reference(x, wq, wk, wv, wp, bp, num_heads=num_heads)
    assert out.shape == (B, T, C)
    # bf16 MXU inputs with f32 accumulation -> loosened tolerance vs f32 reference.
    assert jnp.allclose(out, ref, atol=3e-2, rtol=3e-2), "mismatch vs reference"

    print("KERNEL_OK")
</pallas_src>

<mosaic_0001>
module attributes {stable_mosaic.version = 11 : i64} {
  func.func @mha_kernel(%arg0: i32, %arg1: i32, %arg2: memref<1x8x32xf32, #tpu.memory_space<vmem>>, %arg3: memref<32x96xbf16, #tpu.memory_space<vmem>>, %arg4: memref<4x8x32xbf16, #tpu.memory_space<vmem>>, %arg5: memref<1x32xf32, #tpu.memory_space<vmem>>, %arg6: memref<1x8x32xf32, #tpu.memory_space<vmem>>, %arg7: memref<4x8x8xbf16, #tpu.memory_space<vmem>>, %arg8: memref<4x8x8xbf16, #tpu.memory_space<vmem>>, %arg9: memref<4x8x8xbf16, #tpu.memory_space<vmem>>) attributes {dimension_semantics = [#tpu.dimension_semantics<parallel>, #tpu.dimension_semantics<arbitrary>], iteration_bounds = array<i64: 2, 1>, scalar_prefetch = 0 : i64, scratch_operands = 3 : i64, tpu.core_type = #tpu.core_type<tc>, window_params = [{transform_indices = @transform_0, window_bounds = array<i64: 1, 8, 32>}, {pipeline_mode = #tpu.pipeline_mode<synchronous>, transform_indices = @transform_1, window_bounds = array<i64: 32, 96>}, {pipeline_mode = #tpu.pipeline_mode<synchronous>, transform_indices = @transform_2, window_bounds = array<i64: 4, 8, 32>}, {pipeline_mode = #tpu.pipeline_mode<synchronous>, transform_indices = @transform_3, window_bounds = array<i64: 1, 32>}, {transform_indices = @transform_4, window_bounds = array<i64: 1, 8, 32>}]} {
    %c0_i32 = arith.constant 0 : i32
    %0 = arith.cmpi eq, %arg1, %c0_i32 : i32
    %1 = arith.extui %0 : i1 to i32
    %c0_i32_0 = arith.constant 0 : i32
    %2 = arith.cmpi ne, %1, %c0_i32_0 : i32
    scf.if %2 {
      %c0_24 = arith.constant 0 : index
      %c0_25 = arith.constant 0 : index
      %c0_26 = arith.constant 0 : index
      %43 = vector.load %arg2[%c0_24, %c0_25, %c0_26] : memref<1x8x32xf32, #tpu.memory_space<vmem>>, vector<1x8x32xf32>
      %44 = vector.shape_cast %43 : vector<1x8x32xf32> to vector<8x32xf32>
      %45 = arith.truncf %44 : vector<8x32xf32> to vector<8x32xbf16>
      %c0_27 = arith.constant 0 : index
      %c0_28 = arith.constant 0 : index
      %46 = vector.load %arg3[%c0_27, %c0_28] : memref<32x96xbf16, #tpu.memory_space<vmem>>, vector<32x96xbf16>
      %cst_29 = arith.constant dense<0.000000e+00> : vector<8x96xf32>
      %47 = tpu.matmul %45, %46, %cst_29 {dimension_numbers = #tpu.dot_dimension_numbers<[1], [0], [0], [1], [0, 0, 1, 1], [], []>} : vector<8x32xbf16>, vector<32x96xbf16>, vector<8x96xf32> -> vector<8x96xf32>
      %48 = vector.extract_strided_slice %47 {offsets = [0, 0], sizes = [8, 8], strides = [1, 1]} : vector<8x96xf32> to vector<8x8xf32>
      %49 = arith.truncf %48 : vector<8x8xf32> to vector<8x8xbf16>
      %c0_30 = arith.constant 0 : index
      %c0_31 = arith.constant 0 : index
      %c0_32 = arith.constant 0 : index
      %50 = vector.load %arg7[%c0_30, %c0_31, %c0_32] : memref<4x8x8xbf16, #tpu.memory_space<vmem>>, vector<1x8x8xbf16>
      %51 = vector.shape_cast %50 : vector<1x8x8xbf16> to vector<8x8xbf16>
      %52 = vector.shape_cast %49 : vector<8x8xbf16> to vector<1x8x8xbf16>
      tpu.vector_store %arg7[%c0_30, %c0_31, %c0_32], %52 {strides = array<i32>} : memref<4x8x8xbf16, #tpu.memory_space<vmem>>, vector<1x8x8xbf16>,
      %53 = vector.extract_strided_slice %47 {offsets = [0, 32], sizes = [8, 8], strides = [1, 1]} : vector<8x96xf32> to vector<8x8xf32>
      %54 = arith.truncf %53 : vector<8x8xf32> to vector<8x8xbf16>
      %c0_33 = arith.constant 0 : index
      %c0_34 = arith.constant 0 : index
      %c0_35 = arith.constant 0 : index
      %55 = vector.load %arg8[%c0_33, %c0_34, %c0_35] : memref<4x8x8xbf16, #tpu.memory_space<vmem>>, vector<1x8x8xbf16>
      %56 = vector.shape_cast %55 : vector<1x8x8xbf16> to vector<8x8xbf16>
      %57 = vector.shape_cast %54 : vector<8x8xbf16> to vector<1x8x8xbf16>
      tpu.vector_store %arg8[%c0_33, %c0_34, %c0_35], %57 {strides = array<i32>} : memref<4x8x8xbf16, #tpu.memory_space<vmem>>, vector<1x8x8xbf16>,
      %58 = vector.extract_strided_slice %47 {offsets = [0, 64], sizes = [8, 8], strides = [1, 1]} : vector<8x96xf32> to vector<8x8xf32>
      %59 = arith.truncf %58 : vector<8x8xf32> to vector<8x8xbf16>
      %c0_36 = arith.constant 0 : index
      %c0_37 = arith.constant 0 : index
      %c0_38 = arith.constant 0 : index
      %60 = vector.load %arg9[%c0_36, %c0_37, %c0_38] : memref<4x8x8xbf16, #tpu.memory_space<vmem>>, vector<1x8x8xbf16>
      %61 = vector.shape_cast %60 : vector<1x8x8xbf16> to vector<8x8xbf16>
      %62 = vector.shape_cast %59 : vector<8x8xbf16> to vector<1x8x8xbf16>
      tpu.vector_store %arg9[%c0_36, %c0_37, %c0_38], %62 {strides = array<i32>} : memref<4x8x8xbf16, #tpu.memory_space<vmem>>, vector<1x8x8xbf16>,
      %63 = vector.extract_strided_slice %47 {offsets = [0, 8], sizes = [8, 8], strides = [1, 1]} : vector<8x96xf32> to vector<8x8xf32>
      %64 = arith.truncf %63 : vector<8x8xf32> to vector<8x8xbf16>
      %c1 = arith.constant 1 : index
      %c0_39 = arith.constant 0 : index
      %c0_40 = arith.constant 0 : index
      %65 = vector.load %arg7[%c1, %c0_39, %c0_40] : memref<4x8x8xbf16, #tpu.memory_space<vmem>>, vector<1x8x8xbf16>
      %66 = vector.shape_cast %65 : vector<1x8x8xbf16> to vector<8x8xbf16>
      %67 = vector.shape_cast %64 : vector<8x8xbf16> to vector<1x8x8xbf16>
      tpu.vector_store %arg7[%c1, %c0_39, %c0_40], %67 {strides = array<i32>} : memref<4x8x8xbf16, #tpu.memory_space<vmem>>, vector<1x8x8xbf16>,
      %68 = vector.extract_strided_slice %47 {offsets = [0, 40], sizes = [8, 8], strides = [1, 1]} : vector<8x96xf32> to vector<8x8xf32>
      %69 = arith.truncf %68 : vector<8x8xf32> to vector<8x8xbf16>
      %c1_41 = arith.constant 1 : index
      %c0_42 = arith.constant 0 : index
      %c0_43 = arith.constant 0 : index
      %70 = vector.load %arg8[%c1_41, %c0_42, %c0_43] : memref<4x8x8xbf16, #tpu.memory_space<vmem>>, vector<1x8x8xbf16>
      %71 = vector.shape_cast %70 : vector<1x8x8xbf16> to vector<8x8xbf16>
      %72 = vector.shape_cast %69 : vector<8x8xbf16> to vector<1x8x8xbf16>
      tpu.vector_store %arg8[%c1_41, %c0_42, %c0_43], %72 {strides = array<i32>} : memref<4x8x8xbf16, #tpu.memory_space<vmem>>, vector<1x8x8xbf16>,
      %73 = vector.extract_strided_slice %47 {offsets = [0, 72], sizes = [8, 8], strides = [1, 1]} : vector<8x96xf32> to vector<8x8xf32>
      %74 = arith.truncf %73 : vector<8x8xf32> to vector<8x8xbf16>
      %c1_44 = arith.constant 1 : index
      %c0_45 = arith.constant 0 : index
      %c0_46 = arith.constant 0 : index
      %75 = vector.load %arg9[%c1_44, %c0_45, %c0_46] : memref<4x8x8xbf16, #tpu.memory_space<vmem>>, vector<1x8x8xbf16>
      %76 = vector.shape_cast %75 : vector<1x8x8xbf16> to vector<8x8xbf16>
      %77 = vector.shape_cast %74 : vector<8x8xbf16> to vector<1x8x8xbf16>
      tpu.vector_store %arg9[%c1_44, %c0_45, %c0_46], %77 {strides = array<i32>} : memref<4x8x8xbf16, #tpu.memory_space<vmem>>, vector<1x8x8xbf16>,
      %78 = vector.extract_strided_slice %47 {offsets = [0, 16], sizes = [8, 8], strides = [1, 1]} : vector<8x96xf32> to vector<8x8xf32>
      %79 = arith.truncf %78 : vector<8x8xf32> to vector<8x8xbf16>
      %c2 = arith.constant 2 : index
      %c0_47 = arith.constant 0 : index
      %c0_48 = arith.constant 0 : index
      %80 = vector.load %arg7[%c2, %c0_47, %c0_48] : memref<4x8x8xbf16, #tpu.memory_space<vmem>>, vector<1x8x8xbf16>
      %81 = vector.shape_cast %80 : vector<1x8x8xbf16> to vector<8x8xbf16>
      %82 = vector.shape_cast %79 : vector<8x8xbf16> to vector<1x8x8xbf16>
      tpu.vector_store %arg7[%c2, %c0_47, %c0_48], %82 {strides = array<i32>} : memref<4x8x8xbf16, #tpu.memory_space<vmem>>, vector<1x8x8xbf16>,
      %83 = vector.extract_strided_slice %47 {offsets = [0, 48], sizes = [8, 8], strides = [1, 1]} : vector<8x96xf32> to vector<8x8xf32>
      %84 = arith.truncf %83 : vector<8x8xf32> to vector<8x8xbf16>
      %c2_49 = arith.constant 2 : index
      %c0_50 = arith.constant 0 : index
      %c0_51 = arith.constant 0 : index
      %85 = vector.load %arg8[%c2_49, %c0_50, %c0_51] : memref<4x8x8xbf16, #tpu.memory_space<vmem>>, vector<1x8x8xbf16>
      %86 = vector.shape_cast %85 : vector<1x8x8xbf16> to vector<8x8xbf16>
      %87 = vector.shape_cast %84 : vector<8x8xbf16> to vector<1x8x8xbf16>
      tpu.vector_store %arg8[%c2_49, %c0_50, %c0_51], %87 {strides = array<i32>} : memref<4x8x8xbf16, #tpu.memory_space<vmem>>, vector<1x8x8xbf16>,
      %88 = vector.extract_strided_slice %47 {offsets = [0, 80], sizes = [8, 8], strides = [1, 1]} : vector<8x96xf32> to vector<8x8xf32>
      %89 = arith.truncf %88 : vector<8x8xf32> to vector<8x8xbf16>
      %c2_52 = arith.constant 2 : index
      %c0_53 = arith.constant 0 : index
      %c0_54 = arith.constant 0 : index
      %90 = vector.load %arg9[%c2_52, %c0_53, %c0_54] : memref<4x8x8xbf16, #tpu.memory_space<vmem>>, vector<1x8x8xbf16>
      %91 = vector.shape_cast %90 : vector<1x8x8xbf16> to vector<8x8xbf16>
      %92 = vector.shape_cast %89 : vector<8x8xbf16> to vector<1x8x8xbf16>
      tpu.vector_store %arg9[%c2_52, %c0_53, %c0_54], %92 {strides = array<i32>} : memref<4x8x8xbf16, #tpu.memory_space<vmem>>, vector<1x8x8xbf16>,
      %93 = vector.extract_strided_slice %47 {offsets = [0, 24], sizes = [8, 8], strides = [1, 1]} : vector<8x96xf32> to vector<8x8xf32>
      %94 = arith.truncf %93 : vector<8x8xf32> to vector<8x8xbf16>
      %c3 = arith.constant 3 : index
      %c0_55 = arith.constant 0 : index
      %c0_56 = arith.constant 0 : index
      %95 = vector.load %arg7[%c3, %c0_55, %c0_56] : memref<4x8x8xbf16, #tpu.memory_space<vmem>>, vector<1x8x8xbf16>
      %96 = vector.shape_cast %95 : vector<1x8x8xbf16> to vector<8x8xbf16>
      %97 = vector.shape_cast %94 : vector<8x8xbf16> to vector<1x8x8xbf16>
      tpu.vector_store %arg7[%c3, %c0_55, %c0_56], %97 {strides = array<i32>} : memref<4x8x8xbf16, #tpu.memory_space<vmem>>, vector<1x8x8xbf16>,
      %98 = vector.extract_strided_slice %47 {offsets = [0, 56], sizes = [8, 8], strides = [1, 1]} : vector<8x96xf32> to vector<8x8xf32>
      %99 = arith.truncf %98 : vector<8x8xf32> to vector<8x8xbf16>
      %c3_57 = arith.constant 3 : index
      %c0_58 = arith.constant 0 : index
      %c0_59 = arith.constant 0 : index
      %100 = vector.load %arg8[%c3_57, %c0_58, %c0_59] : memref<4x8x8xbf16, #tpu.memory_space<vmem>>, vector<1x8x8xbf16>
      %101 = vector.shape_cast %100 : vector<1x8x8xbf16> to vector<8x8xbf16>
      %102 = vector.shape_cast %99 : vector<8x8xbf16> to vector<1x8x8xbf16>
      tpu.vector_store %arg8[%c3_57, %c0_58, %c0_59], %102 {strides = array<i32>} : memref<4x8x8xbf16, #tpu.memory_space<vmem>>, vector<1x8x8xbf16>,
      %103 = vector.extract_strided_slice %47 {offsets = [0, 88], sizes = [8, 8], strides = [1, 1]} : vector<8x96xf32> to vector<8x8xf32>
      %104 = arith.truncf %103 : vector<8x8xf32> to vector<8x8xbf16>
      %c3_60 = arith.constant 3 : index
      %c0_61 = arith.constant 0 : index
      %c0_62 = arith.constant 0 : index
      %105 = vector.load %arg9[%c3_60, %c0_61, %c0_62] : memref<4x8x8xbf16, #tpu.memory_space<vmem>>, vector<1x8x8xbf16>
      %106 = vector.shape_cast %105 : vector<1x8x8xbf16> to vector<8x8xbf16>
      %107 = vector.shape_cast %104 : vector<8x8xbf16> to vector<1x8x8xbf16>
      tpu.vector_store %arg9[%c3_60, %c0_61, %c0_62], %107 {strides = array<i32>} : memref<4x8x8xbf16, #tpu.memory_space<vmem>>, vector<1x8x8xbf16>,
    } else {
    }
    %c8_i32 = arith.constant 8 : i32
    %3 = arith.muli %arg1, %c8_i32 : i32
    %4 = tpu.assume_multiple %3, 8 : i32
    %c0 = arith.constant 0 : index
    %c0_1 = arith.constant 0 : index
    %c0_2 = arith.constant 0 : index
    %5 = vector.load %arg7[%c0, %c0_1, %c0_2] : memref<4x8x8xbf16, #tpu.memory_space<vmem>>, vector<4x8x8xbf16>
    %c0_3 = arith.constant 0 : index
    %c0_4 = arith.constant 0 : index
    %c0_5 = arith.constant 0 : index
    %6 = vector.load %arg8[%c0_3, %c0_4, %c0_5] : memref<4x8x8xbf16, #tpu.memory_space<vmem>>, vector<4x8x8xbf16>
    %c0_6 = arith.constant 0 : index
    %c0_7 = arith.constant 0 : index
    %c0_8 = arith.constant 0 : index
    %7 = vector.load %arg9[%c0_6, %c0_7, %c0_8] : memref<4x8x8xbf16, #tpu.memory_space<vmem>>, vector<4x8x8xbf16>
    "tpu.trace_start"() <{level = 10 : i32, message = "hqd,hkd->hqk"}> : () -> ()
    %cst = arith.constant dense<0.000000e+00> : vector<4x8x8xf32>
    %8 = tpu.matmul %5, %6, %cst {dimension_numbers = #tpu.dot_dimension_numbers<[2], [2], [1], [1], [0, 0, 0, 1, 1, 1], [0], [0]>} : vector<4x8x8xbf16>, vector<4x8x8xbf16>, vector<4x8x8xf32> -> vector<4x8x8xf32>
    "tpu.trace_stop"() : () -> ()
    %cst_9 = arith.constant 0.353553385 : f32
    %9 = vector.broadcast %cst_9 : f32 to vector<4x8x8xf32>
    %10 = arith.mulf %8, %9 : vector<4x8x8xf32>
    %11 = tpu.iota {dimensions = array<i32: 0>} : vector<8x8xi32>
    %12 = vector.broadcast %4 : i32 to vector<8x8xi32>
    %13 = arith.addi %12, %11 : vector<8x8xi32>
    %14 = tpu.iota {dimensions = array<i32: 1>} : vector<8x8xi32>
    %15 = arith.cmpi sge, %13, %14 : vector<8x8xi32>
    %16 = vector.shape_cast %15 : vector<8x8xi1> to vector<1x8x8xi1>
    %cst_10 = arith.constant -1.000000e+30 : f32
    %17 = vector.shape_cast %16 : vector<1x8x8xi1> to vector<1x8x8xi1>
    %18 = vector.broadcast %17 : vector<1x8x8xi1> to vector<4x8x8xi1>
    %19 = vector.broadcast %cst_10 : f32 to vector<4x8x8xf32>
    %20 = arith.select %18, %10, %19 : vector<4x8x8xi1>, vector<4x8x8xf32>
    %cst_11 = arith.constant dense<0xFF800000> : vector<4x8xf32>
    %21 = vector.multi_reduction <maximumf>, %20, %cst_11 [2] : vector<4x8x8xf32> to vector<4x8xf32>
    %22 = vector.shape_cast %21 : vector<4x8xf32> to vector<4x8x1xf32>
    %23 = vector.broadcast %22 : vector<4x8x1xf32> to vector<4x8x8xf32>
    %24 = arith.subf %20, %23 : vector<4x8x8xf32>
    %25 = math.exp %24 : vector<4x8x8xf32>
    %cst_12 = arith.constant dense<0.000000e+00> : vector<4x8xf32>
    %26 = vector.multi_reduction <add>, %25, %cst_12 [2] : vector<4x8x8xf32> to vector<4x8xf32>
    %27 = vector.shape_cast %26 : vector<4x8xf32> to vector<4x8x1xf32>
    %28 = tpu.reciprocal %27 {approx = true} : vector<4x8x1xf32> -> vector<4x8x1xf32>
    %29 = vector.broadcast %28 : vector<4x8x1xf32> to vector<4x8x8xf32>
    %30 = arith.mulf %25, %29 : vector<4x8x8xf32>
    %31 = arith.truncf %30 : vector<4x8x8xf32> to vector<4x8x8xbf16>
    "tpu.trace_start"() <{level = 10 : i32, message = "hqk,hkd->hqd"}> : () -> ()
    %cst_13 = arith.constant dense<0.000000e+00> : vector<4x8x8xf32>
    %32 = tpu.matmul %31, %7, %cst_13 {dimension_numbers = #tpu.dot_dimension_numbers<[2], [1], [1], [2], [0, 0, 0, 1, 1, 2], [0], [0]>} : vector<4x8x8xbf16>, vector<4x8x8xbf16>, vector<4x8x8xf32> -> vector<4x8x8xf32>
    "tpu.trace_stop"() : () -> ()
    %33 = arith.truncf %32 : vector<4x8x8xf32> to vector<4x8x8xbf16>
    %c0_14 = arith.constant 0 : index
    %c0_15 = arith.constant 0 : index
    %c0_16 = arith.constant 0 : index
    %34 = vector.load %arg4[%c0_14, %c0_15, %c0_16] : memref<4x8x32xbf16, #tpu.memory_space<vmem>>, vector<4x8x32xbf16>
    "tpu.trace_start"() <{level = 10 : i32, message = "hqd,hdc->hqc"}> : () -> ()
    %cst_17 = arith.constant dense<0.000000e+00> : vector<4x8x32xf32>
    %35 = tpu.matmul %33, %34, %cst_17 {dimension_numbers = #tpu.dot_dimension_numbers<[2], [1], [1], [2], [0, 0, 0, 1, 1, 2], [0], [0]>} : vector<4x8x8xbf16>, vector<4x8x32xbf16>, vector<4x8x32xf32> -> vector<4x8x32xf32>
    "tpu.trace_stop"() : () -> ()
    %cst_18 = arith.constant dense<0.000000e+00> : vector<8x32xf32>
    %36 = vector.multi_reduction <add>, %35, %cst_18 [0] : vector<4x8x32xf32> to vector<8x32xf32>
    %c0_19 = arith.constant 0 : index
    %c0_20 = arith.constant 0 : index
    %37 = vector.load %arg5[%c0_19, %c0_20] : memref<1x32xf32, #tpu.memory_space<vmem>>, vector<1x32xf32>
    %38 = vector.broadcast %37 : vector<1x32xf32> to vector<8x32xf32>
    %39 = arith.addf %36, %38 : vector<8x32xf32>
    %c0_21 = arith.constant 0 : index
    %c0_22 = arith.constant 0 : index
    %c0_23 = arith.constant 0 : index
    %40 = vector.load %arg6[%c0_21, %c0_22, %c0_23] : memref<1x8x32xf32, #tpu.memory_space<vmem>>, vector<1x8x32xf32>
    %41 = vector.shape_cast %40 : vector<1x8x32xf32> to vector<8x32xf32>
    %42 = vector.shape_cast %39 : vector<8x32xf32> to vector<1x8x32xf32>
    tpu.vector_store %arg6[%c0_21, %c0_22, %c0_23], %42 {strides = array<i32>} : memref<1x8x32xf32, #tpu.memory_space<vmem>>, vector<1x8x32xf32>,
    return
  }
  func.func @transform_0(%arg0: i32, %arg1: i32) -> (i32, i32, i32) {
    %c0_i32 = arith.constant 0 : i32
    %c0_i32_0 = arith.constant 0 : i32
    %c0_i32_1 = arith.constant 0 : i32
    return %arg0, %c0_i32, %c0_i32_0 : i32, i32, i32
  }
  func.func @transform_1(%arg0: i32, %arg1: i32) -> (i32, i32) {
    %c0_i32 = arith.constant 0 : i32
    %c0_i32_0 = arith.constant 0 : i32
    %c0_i32_1 = arith.constant 0 : i32
    return %c0_i32, %c0_i32_0 : i32, i32
  }
  func.func @transform_2(%arg0: i32, %arg1: i32) -> (i32, i32, i32) {
    %c0_i32 = arith.constant 0 : i32
    %c0_i32_0 = arith.constant 0 : i32
    %c0_i32_1 = arith.constant 0 : i32
    %c0_i32_2 = arith.constant 0 : i32
    return %c0_i32, %c0_i32_0, %c0_i32_1 : i32, i32, i32
  }
  func.func @transform_3(%arg0: i32, %arg1: i32) -> (i32, i32) {
    %c0_i32 = arith.constant 0 : i32
    %c0_i32_0 = arith.constant 0 : i32
    %c0_i32_1 = arith.constant 0 : i32
    return %c0_i32, %c0_i32_0 : i32, i32
  }
  func.func @transform_4(%arg0: i32, %arg1: i32) -> (i32, i32, i32) {
    %c0_i32 = arith.constant 0 : i32
    %c0_i32_0 = arith.constant 0 : i32
    return %arg0, %arg1, %c0_i32 : i32, i32, i32
  }
}

</mosaic_0001>

<llo_original>
// kernel: tpu_custom_call.1
$region0: #{tpu_custom_call.1}
  #allocation0 [shape = 'u32[]', space=smem, size = 0x4, offset = 0x4, fixed_abs, tag = 'smem constant byte address 0x4 - core index']
  #allocation1 [shape = 'u32[144,128]{1,0:T(1,128)}', space=vmem, size = 0x12000, scoped, tag = 'internal scratch']
  #allocation2 [shape = 'bf16[4,8,8]{2,1,0:T(8,128)(2,1)}', space=vmem, size = 0x2000, scoped, tag = 'scratch operand']
  #allocation3 [shape = 'bf16[4,8,8]{2,1,0:T(8,128)(2,1)}', space=vmem, size = 0x2000, scoped, tag = 'scratch operand']
  #allocation4 [shape = 'bf16[4,8,8]{2,1,0:T(8,128)(2,1)}', space=vmem, size = 0x2000, scoped, tag = 'scratch operand']
  %s0 = inlined_call_operand.hbm [shape: f32[2,8,32], index: 0, kind: input, shape index: {}]
  %s1 = inlined_call_operand.hbm [shape: bf16[32,96], index: 1, kind: input, shape index: {}]
  %s2 = inlined_call_operand.hbm [shape: bf16[4,8,32], index: 2, kind: input, shape index: {}]
  %s3 = inlined_call_operand.vmem [shape: f32[1,32], index: 3, kind: input, shape index: {}]
  %s4 = inlined_call_operand.hbm [shape: f32[2,8,32], index: 4, kind: output, shape index: {}]
  %s5 = sld [smem:[#allocation0]]
  $region65: #{tpu_custom_call.1} parent=0
    _
  %s7 = ssub.s32 1, %s5
  %s8 = scalar_select 0, %s7, %s5
  $region1: #{tpu_custom_call.1} parent=0
    #allocation5 [shape = 'u8[8192]{0}', space=vmem, size = 0x2000, scoped, tag = 'input window, operand 0']
    #allocation6 [shape = 's32[2]{0}', space=sflag, size = 0x8, scoped, tag = 'scoped memory for tpu_custom_call.1']
    #allocation7 [shape = 's32[2]{0}', space=sflag, size = 0x8, scoped, tag = 'scoped memory for tpu_custom_call.1']
    #allocation8 [shape = 'u8[8192]{0}', space=vmem, size = 0x2000, scoped, tag = 'input window, operand 1, single buffered']
    #allocation9 [shape = 's32[1]{0}', space=sflag, size = 0x4, scoped, tag = 'scoped memory for tpu_custom_call.1']
    #allocation10 [shape = 'u8[8192]{0}', space=vmem, size = 0x2000, scoped, tag = 'input window, operand 2, single buffered']
    #allocation11 [shape = 'u8[8192]{0}', space=vmem, size = 0x2000, scoped, tag = 'output window, operand 0']
    %9 = vsyncpa [#allocation6], 0
    %s10 = scalar_lea.sflag [#allocation6], 1
    %11 = vsyncpa %s10, 0
    %12 = vsyncpa [#allocation9], 0
    %13 = vsyncpa [#allocation7], 0
    %s14 = scalar_lea.sflag [#allocation7], 1
    %15 = vsyncpa %s14, 0
    loop: start=0, step=1, limit=4
    $region2: #{tpu_custom_call.1} parent=1 // loop_pre_header
      _
    $region3: #{tpu_custom_call.1} parent=1 // loop_header
      %s17 = sphi 0, %s21
      %p18 = scmp.ge.s32.totalorder %s17, 4
      %s24 = sphi 0, %s36
      %s25 = sphi 0, %s32
      %s26 = sphi 0, %s24
      %s27 = sphi 0, %s25
      %s28 = sphi 0, %s26
      %s29 = sphi 0, %s27
      %s39 = sphi 0, %s41
      %s42 = sphi 0, %s39
      %s43 = sphi 0, %s42
      %s59 = sphi 0, %s43
      %s63 = sphi 0, %s63
      %s65 = sphi 0, %s63
      %s66 = sphi 0, %s65
      %s80 = sphi 0, %s66
      %s84 = sphi 0, %s84
      %s86 = sphi 0, %s84
      %s87 = sphi 0, %s86
      %s101 = sphi 0, %s87
      %s105 = sphi 0, %s105
      %s107 = sphi 0, %s105
      %s108 = sphi 0, %s107
      %s122 = sphi 0, %s108
      %s130 = sphi 0, %s132
      %s133 = sphi 0, %s130
      %s134 = sphi 0, %s133
      %s150 = sphi 0, %s134
    $region4: #{tpu_custom_call.1} parent=1 // loop_header_branch
      %20 = sbr.rel (%p18) target = $region8
    $region5: #{tpu_custom_call.1} parent=1 // loop_body
      %s22 = ssub.s32 %s17, 1
      %s23 = ssub.s32 %s17, 2
      %s30 = sadd.s32 1, %s25
      %p31 = scmp.ge.s32.totalorder %s30, 1
      %s32 = scalar_select %p31, 0, %s30
      %s33 = sadd.s32 1, %s24
      %s34 = scalar_select %p31, %s33, %s24
      %p35 = scmp.ge.s32.totalorder %s34, 2
      %s36 = scalar_select %p35, 0, %s34
      %s37 = ssub.s32 %s24, %s36
      %p38 = scmp.eq.s32.totalorder %s37, 0
      %s40 = sadd.s32 %s39, 1
      %s41 = scalar_select %p38, %s39, %s40
      %p44 = pneg %p38
      %p45 = scmp.eq.s32.totalorder %s17, 1
      %p46 = por %p44, %p45
      %p47 = scmp.ne.s32.totalorder %s39, %s42
      %p48 = scmp.eq.s32.totalorder %s17, 0
      %p49 = por %p47, %p48
      %p50 = scmp.ne.s32.totalorder %s39, %s42
      %p51 = scmp.eq.s32.totalorder %s22, 1
      %p52 = por %p50, %p51
      %p53 = scmp.ne.s32.totalorder %s42, %s43
      %p54 = scmp.eq.s32.totalorder %s22, 0
      %p55 = por %p53, %p54
      %p56 = scmp.ne.s32.totalorder %s42, %s43
      %p57 = scmp.eq.s32.totalorder %s23, 1
      %p58 = por %p56, %p57
      %p60 = scmp.ne.s32.totalorder %s43, %s59
      %p61 = scmp.eq.s32.totalorder %s23, 0
      %p62 = por %p60, %p61
      %s64 = sadd.s32 %s63, 1
      %p67 = scmp.eq.s32.totalorder %s17, 1
      %p68 = scmp.ne.s32.totalorder %s63, %s65
      %p69 = scmp.eq.s32.totalorder %s17, 0
      %p70 = por %p68, %p69
      %p71 = scmp.ne.s32.totalorder %s63, %s65
      %p72 = scmp.eq.s32.totalorder %s22, 1
      %p73 = por %p71, %p72
      %p74 = scmp.ne.s32.totalorder %s65, %s66
      %p75 = scmp.eq.s32.totalorder %s22, 0
      %p76 = por %p74, %p75
      %p77 = scmp.ne.s32.totalorder %s65, %s66
      %p78 = scmp.eq.s32.totalorder %s23, 1
      %p79 = por %p77, %p78
      %p81 = scmp.ne.s32.totalorder %s66, %s80
      %p82 = scmp.eq.s32.totalorder %s23, 0
      %p83 = por %p81, %p82
      %s85 = sadd.s32 %s84, 1
      %p88 = scmp.eq.s32.totalorder %s17, 1
      %p89 = scmp.ne.s32.totalorder %s84, %s86
      %p90 = scmp.eq.s32.totalorder %s17, 0
      %p91 = por %p89, %p90
      %p92 = scmp.ne.s32.totalorder %s84, %s86
      %p93 = scmp.eq.s32.totalorder %s22, 1
      %p94 = por %p92, %p93
      %p95 = scmp.ne.s32.totalorder %s86, %s87
      %p96 = scmp.eq.s32.totalorder %s22, 0
      %p97 = por %p95, %p96
      %p98 = scmp.ne.s32.totalorder %s86, %s87
      %p99 = scmp.eq.s32.totalorder %s23, 1
      %p100 = por %p98, %p99
      %p102 = scmp.ne.s32.totalorder %s87, %s101
      %p103 = scmp.eq.s32.totalorder %s23, 0
      %p104 = por %p102, %p103
      %s106 = sadd.s32 %s105, 1
      %p109 = scmp.eq.s32.totalorder %s17, 1
      %p110 = scmp.ne.s32.totalorder %s105, %s107
      %p111 = scmp.eq.s32.totalorder %s17, 0
      %p112 = por %p110, %p111
      %p113 = scmp.ne.s32.totalorder %s105, %s107
      %p114 = scmp.eq.s32.totalorder %s22, 1
      %p115 = por %p113, %p114
      %p116 = scmp.ne.s32.totalorder %s107, %s108
      %p117 = scmp.eq.s32.totalorder %s22, 0
      %p118 = por %p116, %p117
      %p119 = scmp.ne.s32.totalorder %s107, %s108
      %p120 = scmp.eq.s32.totalorder %s23, 1
      %p121 = por %p119, %p120
      %p123 = scmp.ne.s32.totalorder %s108, %s122
      %p124 = scmp.eq.s32.totalorder %s23, 0
      %p125 = por %p123, %p124
      %s126 = ssub.s32 %s24, %s36
      %s127 = ssub.s32 %s25, %s32
      %s128 = sor.u32 %s126, %s127
      %p129 = scmp.eq.s32.totalorder %s128, 0
      %s131 = sadd.s32 %s130, 1
      %s132 = scalar_select %p129, %s130, %s131
      %p135 = pneg %p129
      %p136 = scmp.eq.s32.totalorder %s17, 1
      %p137 = por %p135, %p136
      %p138 = scmp.ne.s32.totalorder %s130, %s133
      %p139 = scmp.eq.s32.totalorder %s17, 0
      %p140 = por %p138, %p139
      %p141 = scmp.ne.s32.totalorder %s130, %s133
      %p142 = scmp.eq.s32.totalorder %s22, 1
      %p143 = por %p141, %p142
      %p144 = scmp.ne.s32.totalorder %s133, %s134
      %p145 = scmp.eq.s32.totalorder %s22, 0
      %p146 = por %p144, %p145
      %p147 = scmp.ne.s32.totalorder %s133, %s134
      %p148 = scmp.eq.s32.totalorder %s23, 1
      %p149 = por %p147, %p148
      %p151 = scmp.ne.s32.totalorder %s134, %s150
      %p152 = scmp.eq.s32.totalorder %s23, 0
      %p153 = por %p151, %p152
      %p154 = scmp.le.s32.totalorder 1, %s17
      %p155 = scmp.lt.s32.totalorder %s17, 3
      %p156 = pnand %p154, %p155
      %p157 = pneg %p156
      // Predicated region
      $region9: #{tpu_custom_call.1} parent=5 // pred_check
        _
      $region10: #{tpu_custom_call.1} parent=5 // pred_check_branch
        %159 = sbr.rel (%p156) target = $region12
      $region11: #{tpu_custom_call.1} parent=5 // pred_region
        %s160 = ssub.s32 %s17, 1
        // Predicated region
        $region13: #{tpu_custom_call.1} parent=11 // pred_check
          %p161 = pneg %p76
        $region14: #{tpu_custom_call.1} parent=11 // pred_check_branch
          %163 = sbr.rel (%p161) target = $region16
        $region15: #{tpu_custom_call.1} parent=11 // pred_region
          %s165 = ssub.s32 256, 256
          %166 = vsyncadd [#allocation9], %s165
          %s167 = sshll.u32 [#allocation8], 4
          %s168 = int_to_ptr.vmem [resolvable:$true] %s167
          %173 = dma.hbm_to_vmem [thread:$0]  %s1, 256, %s168, [#allocation9], 64, 64, 4
        $region16: #{tpu_custom_call.1} parent=11 // pred_fallthru
          _
        // Predicated region
        $region17: #{tpu_custom_call.1} parent=11 // pred_check
          %p174 = pneg %p97
        $region18: #{tpu_custom_call.1} parent=11 // pred_check_branch
          %176 = sbr.rel (%p174) target = $region20
        $region19: #{tpu_custom_call.1} parent=11 // pred_region
          %s178 = ssub.s32 256, 256
          %179 = vsyncadd [#allocation9], %s178
          %s180 = sshll.u32 [#allocation10], 4
          %s181 = int_to_ptr.vmem [resolvable:$true] %s180
          %186 = dma.hbm_to_vmem [thread:$0]  %s2, 256, %s181, [#allocation9], 64, 64, 4
        $region20: #{tpu_custom_call.1} parent=11 // pred_fallthru
          _
        // Predicated region
        $region21: #{tpu_custom_call.1} parent=11 // pred_check
          %p187 = pneg %p118
        $region22: #{tpu_custom_call.1} parent=11 // pred_check_branch
          %189 = sbr.rel (%p187) target = $region24
        $region23: #{tpu_custom_call.1} parent=11 // pred_region
          _
        $region24: #{tpu_custom_call.1} parent=11 // pred_fallthru
          _
      $region12: #{tpu_custom_call.1} parent=5 // pred_fallthru
        _
      %p190 = scmp.lt.s32.totalorder %s17, 2
      // Predicated region
      $region25: #{tpu_custom_call.1} parent=5 // pred_check
        %p191 = pneg %p190
      $region26: #{tpu_custom_call.1} parent=5 // pred_check_branch
        %193 = sbr.rel (%p191) target = $region28
      $region27: #{tpu_custom_call.1} parent=5 // pred_region
        // Predicated region
        $region29: #{tpu_custom_call.1} parent=27 // pred_check
          %p194 = pneg %p49
        $region30: #{tpu_custom_call.1} parent=27 // pred_check_branch
          %196 = sbr.rel (%p194) target = $region32
        $region31: #{tpu_custom_call.1} parent=27 // pred_region
          %s197 = sand.u32 %s39, 1
          %s198 = scalar_lea.sflag [#allocation6], %s197
          %s199 = sand.u32 %s39, 1
          %s200 = smul.addr %s199, 8
          %s201 = scalar_lea.vmem [#allocation5], %s200
          %s203 = ssub.s32 128, 128
          %204 = vsyncadd %s198, %s203
          %s205 = smul.addr %s24, 128
          %s206 = scalar_lea.hbm %s0, %s205
          %s208 = sshll.u32 %s201, 4
          %s209 = int_to_ptr.vmem [resolvable:$true] %s208
          %211 = dma.hbm_to_vmem [thread:$0]  %s206, 128, %s209, %s198
        $region32: #{tpu_custom_call.1} parent=27 // pred_fallthru
          _
      $region28: #{tpu_custom_call.1} parent=5 // pred_fallthru
        _
      %p212 = scmp.le.s32.totalorder 1, %s17
      %p213 = scmp.lt.s32.totalorder %s17, 3
      %p214 = pnand %p212, %p213
      %p215 = pneg %p214
      // Predicated region
      $region33: #{tpu_custom_call.1} parent=5 // pred_check
        _
      $region34: #{tpu_custom_call.1} parent=5 // pred_check_branch
        %217 = sbr.rel (%p214) target = $region36
      $region35: #{tpu_custom_call.1} parent=5 // pred_region
        %s218 = ssub.s32 %s17, 1
        %s219 = sand.u32 %s42, 1
        %s220 = scalar_lea.sflag [#allocation6], %s219
        %s221 = sand.u32 %s42, 1
        %s222 = smul.addr %s221, 8
        %s223 = scalar_lea.vmem [#allocation5], %s222
        // Predicated region
        $region37: #{tpu_custom_call.1} parent=35 // pred_check
          %p224 = pneg %p55
        $region38: #{tpu_custom_call.1} parent=35 // pred_check_branch
          %226 = sbr.rel (%p224) target = $region40
        $region39: #{tpu_custom_call.1} parent=35 // pred_region
          %227 = dma.done %s220, 128
        $region40: #{tpu_custom_call.1} parent=35 // pred_fallthru
          _
        // Predicated region
        $region41: #{tpu_custom_call.1} parent=35 // pred_check
          %p228 = pneg %p76
        $region42: #{tpu_custom_call.1} parent=35 // pred_check_branch
          %230 = sbr.rel (%p228) target = $region44
        $region43: #{tpu_custom_call.1} parent=35 // pred_region
          %231 = dma.done [#allocation9], 256
        $region44: #{tpu_custom_call.1} parent=35 // pred_fallthru
          _
        // Predicated region
        $region45: #{tpu_custom_call.1} parent=35 // pred_check
          %p232 = pneg %p97
        $region46: #{tpu_custom_call.1} parent=35 // pred_check_branch
          %234 = sbr.rel (%p232) target = $region48
        $region47: #{tpu_custom_call.1} parent=35 // pred_region
          %235 = dma.done [#allocation9], 256
        $region48: #{tpu_custom_call.1} parent=35 // pred_fallthru
          _
        %s236 = sand.u32 %s42, 1
        %s237 = scalar_lea.sflag [#allocation6], %s236
        %s238 = sand.u32 %s42, 1
        %s239 = smul.addr %s238, 8
        %s240 = scalar_lea.vmem [#allocation5], %s239
        %p241 = pneg %p55
        %p242 = pneg %p52
        %p243 = pneg %p76
        %p244 = pneg %p73
        %p245 = pneg %p97
        %p246 = pneg %p94
        %p247 = pneg %p118
        %p248 = pneg %p115
        %p249 = pneg %p146
        %p250 = pneg %p143
        %s251 = sand.u32 %s133, 1
        %s252 = scalar_lea.sflag [#allocation7], %s251
        %s253 = sand.u32 %s133, 1
        %s254 = smul.addr %s253, 8
        %s255 = scalar_lea.vmem [#allocation11], %s254
        %p257 = scmp.eq.s32.totalorder %s27, 0
        // Predicated region
        $region49: #{tpu_custom_call.1} parent=35 // pred_check
          %p258 = pneg %p257
        $region50: #{tpu_custom_call.1} parent=35 // pred_check_branch
          %260 = sbr.rel (%p258) target = $region52
        $region51: #{tpu_custom_call.1} parent=35 // pred_region
          %v261 = vld [vmem:[%s223] sm:$0xff]
          %v262 = vpack.c.bf16 %v261, %v261
          %v263 = vld [vmem:[#allocation8] sm:$0xf]
          %v264 = vld [vmem:[#allocation8 + $0x4] sm:$0xf]
          %v265 = vld [vmem:[#allocation8 + $0x8] sm:$0xf]
          %v266 = vld [vmem:[#allocation8 + $0xc] sm:$0xf]
          %v271 = vunpack.c.l.b16 %v263
          %v272 = vunpack.c.l.b16 %v264
          %v273 = vunpack.c.l.b16 %v265
          %v274 = vunpack.c.l.b16 %v266
          %v275 = vpack.c.b16 %v272, %v271
          %v276 = vpack.c.b16 %v274, %v273
          %vm279 = vcmask 261120
          %v281 = vsel %vm279, %v262, 0
          %283 = vmatprep.subr.bf16.mxu0 0
          %284 = vmatpush1.bf16.msra.mxu0 %v275
          %285 = vmatprep.subr.bf16.mxu0 0
          %286 = vmatpush1.bf16.msra.mxu0 %v276
          %287 = vmatprep.subr.bf16.mxu0 0
          %288 = vmatpush1.bf16.msra.mxu0 0
          %289 = vmatprep.subr.bf16.mxu0 0
          %290 = vmatpush1.bf16.msra.mxu0 0
          %291 = vmatprep.subr.bf16.mxu0 0
          %292 = vmatpush1.bf16.msra.mxu0 0
          %293 = vmatprep.subr.bf16.mxu0 0
          %294 = vmatpush1.bf16.msra.mxu0 0
          %295 = vmatprep.subr.bf16.mxu0 0
          %296 = vmatpush1.bf16.msra.mxu0 0
          %297 = vmatprep.subr.bf16.mxu0 0
          %298 = vmatpush1.bf16.msra.mxu0 0
          %299 = vmatprep.subr.bf16.mxu0 0
          %300 = vmatpush1.bf16.msra.mxu0 0
          %301 = vmatprep.subr.bf16.mxu0 0
          %302 = vmatpush1.bf16.msra.mxu0 0
          %303 = vmatprep.subr.bf16.mxu0 0
          %304 = vmatpush1.bf16.msra.mxu0 0
          %305 = vmatprep.subr.bf16.mxu0 0
          %306 = vmatpush1.bf16.msra.mxu0 0
          %307 = vmatprep.subr.bf16.mxu0 0
          %308 = vmatpush1.bf16.msra.mxu0 0
          %309 = vmatprep.subr.bf16.mxu0 0
          %310 = vmatpush1.bf16.msra.mxu0 0
          %311 = vmatprep.subr.bf16.mxu0 0
          %312 = vmatpush1.bf16.msra.mxu0 0
          %313 = vmatprep.subr.bf16.mxu0 0
          %314 = vmatpush1.bf16.msra.mxu0 0
          %315 = vmatprep.mubr.bf16.mxu0 0
          %316 = vmatmul.mubr.bf16.gmra.mrb[0].mxu0 %v281
          %v317 = vpop.f32.mrb[0].mxu0
          %v318 = vadd.f32 0.0, %v317
          %v319 = vpop.f32.mrb[0].mxu0
          %v320 = vpop.f32.mrb[0].mxu0
          %v321 = vpop.f32.mrb[0].mxu0
          %322 = vdwg.mxu0
          %v323 = vpack.c.bf16 %v318, %v318
          %vm324 = vcmask 60416
          %325 = vst.msk [vmem:[#allocation2] sm:$0xf] %vm324, %v323
          %v327 = vunpack.c.l.b16 %v323
          %v328 = vpack.c.b16 %v327, %v327
          %329 = vrot.lane.b32.xlu0 %v328, 96
          %v330 = vpop.permute.xlu0 %329
          %332 = vst.msk [vmem:[#allocation3] sm:$0xf] %vm324, %v330
          %333 = vrot.lane.b32.xlu0 %v328, 64
          %v334 = vpop.permute.xlu0 %333
          %336 = vst.msk [vmem:[#allocation4] sm:$0xf] %vm324, %v334
          %337 = vrot.lane.b32.xlu0 %v328, 120
          %v338 = vpop.permute.xlu0 %337
          %s340 = scalar_lea.vmem [#allocation2], 4
          %341 = vst.msk [vmem:[%s340] sm:$0xf] %vm324, %v338
          %342 = vrot.lane.b32.xlu0 %v328, 88
          %v343 = vpop.permute.xlu0 %342
          %s345 = scalar_lea.vmem [#allocation3], 4
          %346 = vst.msk [vmem:[%s345] sm:$0xf] %vm324, %v343
          %347 = vrot.lane.b32.xlu0 %v328, 56
          %v348 = vpop.permute.xlu0 %347
          %s350 = scalar_lea.vmem [#allocation4], 4
          %351 = vst.msk [vmem:[%s350] sm:$0xf] %vm324, %v348
          %352 = vrot.lane.b32.xlu0 %v328, 112
          %v353 = vpop.permute.xlu0 %352
          %s355 = scalar_lea.vmem [#allocation2], 8
          %356 = vst.msk [vmem:[%s355] sm:$0xf] %vm324, %v353
          %357 = vrot.lane.b32.xlu0 %v328, 80
          %v358 = vpop.permute.xlu0 %357
          %s360 = scalar_lea.vmem [#allocation3], 8
          %361 = vst.msk [vmem:[%s360] sm:$0xf] %vm324, %v358
          %362 = vrot.lane.b32.xlu0 %v328, 48
          %v363 = vpop.permute.xlu0 %362
          %s365 = scalar_lea.vmem [#allocation4], 8
          %366 = vst.msk [vmem:[%s365] sm:$0xf] %vm324, %v363
          %367 = vrot.lane.b32.xlu0 %v328, 104
          %v368 = vpop.permute.xlu0 %367
          %s370 = scalar_lea.vmem [#allocation2], 12
          %371 = vst.msk [vmem:[%s370] sm:$0xf] %vm324, %v368
          %372 = vrot.lane.b32.xlu0 %v328, 72
          %v373 = vpop.permute.xlu0 %372
          %s375 = scalar_lea.vmem [#allocation3], 12
          %376 = vst.msk [vmem:[%s375] sm:$0xf] %vm324, %v373
          %377 = vrot.lane.b32.xlu0 %v328, 40
          %v378 = vpop.permute.xlu0 %377
          %s380 = scalar_lea.vmem [#allocation4], 12
          %381 = vst.msk [vmem:[%s380] sm:$0xf] %vm324, %v378
        $region52: #{tpu_custom_call.1} parent=35 // pred_fallthru
          _
        %s382 = smul.u32 %s27, 8
        %v383 = vld [vmem:[#allocation2] sm:$0xf]
        %v384 = vld [vmem:[#allocation2 + $0x4] sm:$0xf]
        %v385 = vld [vmem:[#allocation2 + $0x8] sm:$0xf]
        %v386 = vld [vmem:[#allocation2 + $0xc] sm:$0xf]
        %v387 = vld [vmem:[#allocation3] sm:$0xf]
        %v388 = vld [vmem:[#allocation3 + $0x4] sm:$0xf]
        %v389 = vld [vmem:[#allocation3 + $0x8] sm:$0xf]
        %v390 = vld [vmem:[#allocation3 + $0xc] sm:$0xf]
        %v391 = vld [vmem:[#allocation4] sm:$0xf]
        %v392 = vld [vmem:[#allocation4 + $0x4] sm:$0xf]
        %v393 = vld [vmem:[#allocation4 + $0x8] sm:$0xf]
        %v394 = vld [vmem:[#allocation4 + $0xc] sm:$0xf]
        %vm395 = vcmask 64512
        %v397 = vsel %vm395, %v383, 0
        %v400 = vsel %vm395, %v387, 0
        %402 = vmatprep.subr.bf16.mxu0 0
        %403 = vmatpush1.bf16.xpose.msra.mxu0 %v400
        %404 = vmatprep.subr.bf16.mxu0 0
        %405 = vmatpush1.bf16.xpose.msra.mxu0 0
        %406 = vmatprep.subr.bf16.mxu0 0
        %407 = vmatpush1.bf16.xpose.msra.mxu0 0
        %408 = vmatprep.subr.bf16.mxu0 0
        %409 = vmatpush1.bf16.xpose.msra.mxu0 0
        %410 = vmatprep.subr.bf16.mxu0 0
        %411 = vmatpush1.bf16.xpose.msra.mxu0 0
        %412 = vmatprep.subr.bf16.mxu0 0
        %413 = vmatpush1.bf16.xpose.msra.mxu0 0
        %414 = vmatprep.subr.bf16.mxu0 0
        %415 = vmatpush1.bf16.xpose.msra.mxu0 0
        %416 = vmatprep.subr.bf16.mxu0 0
        %417 = vmatpush1.bf16.xpose.msra.mxu0 0
        %418 = vmatprep.subr.bf16.mxu0 0
        %419 = vmatpush1.bf16.xpose.msra.mxu0 0
        %420 = vmatprep.subr.bf16.mxu0 0
        %421 = vmatpush1.bf16.xpose.msra.mxu0 0
        %422 = vmatprep.subr.bf16.mxu0 0
        %423 = vmatpush1.bf16.xpose.msra.mxu0 0
        %424 = vmatprep.subr.bf16.mxu0 0
        %425 = vmatpush1.bf16.xpose.msra.mxu0 0
        %426 = vmatprep.subr.bf16.mxu0 0
        %427 = vmatpush1.bf16.xpose.msra.mxu0 0
        %428 = vmatprep.subr.bf16.mxu0 0
        %429 = vmatpush1.bf16.xpose.msra.mxu0 0
        %430 = vmatprep.subr.bf16.mxu0 0
        %431 = vmatpush1.bf16.xpose.msra.mxu0 0
        %432 = vmatprep.subr.bf16.mxu0 0
        %433 = vmatpush1.bf16.xpose.msra.mxu0 0
        %434 = vmatprep.mubr.bf16.mxu0 0
        %435 = vmatmul.mubr.bf16.gmra.mrb[0].mxu0 %v397
        %v436 = vpop.f32.mrb[0].mxu0
        %v437 = vadd.f32 0.0, %v436
        %v438 = vpop.f32.mrb[0].mxu0
        %v439 = vpop.f32.mrb[0].mxu0
        %v440 = vpop.f32.mrb[0].mxu0
        %441 = vdwg.mxu0
        %v443 = vsel %vm395, %v384, 0
        %v446 = vsel %vm395, %v388, 0
        %448 = vmatprep.subr.bf16.mxu0 0
        %449 = vmatpush1.bf16.xpose.msra.mxu0 %v446
        %450 = vmatprep.subr.bf16.mxu0 0
        %451 = vmatpush1.bf16.xpose.msra.mxu0 0
        %452 = vmatprep.subr.bf16.mxu0 0
        %453 = vmatpush1.bf16.xpose.msra.mxu0 0
        %454 = vmatprep.subr.bf16.mxu0 0
        %455 = vmatpush1.bf16.xpose.msra.mxu0 0
        %456 = vmatprep.subr.bf16.mxu0 0
        %457 = vmatpush1.bf16.xpose.msra.mxu0 0
        %458 = vmatprep.subr.bf16.mxu0 0
        %459 = vmatpush1.bf16.xpose.msra.mxu0 0
        %460 = vmatprep.subr.bf16.mxu0 0
        %461 = vmatpush1.bf16.xpose.msra.mxu0 0
        %462 = vmatprep.subr.bf16.mxu0 0
        %463 = vmatpush1.bf16.xpose.msra.mxu0 0
        %464 = vmatprep.subr.bf16.mxu0 0
        %465 = vmatpush1.bf16.xpose.msra.mxu0 0
        %466 = vmatprep.subr.bf16.mxu0 0
        %467 = vmatpush1.bf16.xpose.msra.mxu0 0
        %468 = vmatprep.subr.bf16.mxu0 0
        %469 = vmatpush1.bf16.xpose.msra.mxu0 0
        %470 = vmatprep.subr.bf16.mxu0 0
        %471 = vmatpush1.bf16.xpose.msra.mxu0 0
        %472 = vmatprep.subr.bf16.mxu0 0
        %473 = vmatpush1.bf16.xpose.msra.mxu0 0
        %474 = vmatprep.subr.bf16.mxu0 0
        %475 = vmatpush1.bf16.xpose.msra.mxu0 0
        %476 = vmatprep.subr.bf16.mxu0 0
        %477 = vmatpush1.bf16.xpose.msra.mxu0 0
        %478 = vmatprep.subr.bf16.mxu0 0
        %479 = vmatpush1.bf16.xpose.msra.mxu0 0
        %480 = vmatprep.mubr.bf16.mxu0 0
        %481 = vmatmul.mubr.bf16.gmra.mrb[0].mxu0 %v443
        %v482 = vpop.f32.mrb[0].mxu0
        %v483 = vadd.f32 0.0, %v482
        %v484 = vpop.f32.mrb[0].mxu0
        %v485 = vpop.f32.mrb[0].mxu0
        %v486 = vpop.f32.mrb[0].mxu0
        %487 = vdwg.mxu0
        %v489 = vsel %vm395, %v385, 0
        %v492 = vsel %vm395, %v389, 0
        %494 = vmatprep.subr.bf16.mxu0 0
        %495 = vmatpush1.bf16.xpose.msra.mxu0 %v492
        %496 = vmatprep.subr.bf16.mxu0 0
        %497 = vmatpush1.bf16.xpose.msra.mxu0 0
        %498 = vmatprep.subr.bf16.mxu0 0
        %499 = vmatpush1.bf16.xpose.msra.mxu0 0
        %500 = vmatprep.subr.bf16.mxu0 0
        %501 = vmatpush1.bf16.xpose.msra.mxu0 0
        %502 = vmatprep.subr.bf16.mxu0 0
        %503 = vmatpush1.bf16.xpose.msra.mxu0 0
        %504 = vmatprep.subr.bf16.mxu0 0
        %505 = vmatpush1.bf16.xpose.msra.mxu0 0
        %506 = vmatprep.subr.bf16.mxu0 0
        %507 = vmatpush1.bf16.xpose.msra.mxu0 0
        %508 = vmatprep.subr.bf16.mxu0 0
        %509 = vmatpush1.bf16.xpose.msra.mxu0 0
        %510 = vmatprep.subr.bf16.mxu0 0
        %511 = vmatpush1.bf16.xpose.msra.mxu0 0
        %512 = vmatprep.subr.bf16.mxu0 0
        %513 = vmatpush1.bf16.xpose.msra.mxu0 0
        %514 = vmatprep.subr.bf16.mxu0 0
        %515 = vmatpush1.bf16.xpose.msra.mxu0 0
        %516 = vmatprep.subr.bf16.mxu0 0
        %517 = vmatpush1.bf16.xpose.msra.mxu0 0
        %518 = vmatprep.subr.bf16.mxu0 0
        %519 = vmatpush1.bf16.xpose.msra.mxu0 0
        %520 = vmatprep.subr.bf16.mxu0 0
        %521 = vmatpush1.bf16.xpose.msra.mxu0 0
        %522 = vmatprep.subr.bf16.mxu0 0
        %523 = vmatpush1.bf16.xpose.msra.mxu0 0
        %524 = vmatprep.subr.bf16.mxu0 0
        %525 = vmatpush1.bf16.xpose.msra.mxu0 0
        %526 = vmatprep.mubr.bf16.mxu0 0
        %527 = vmatmul.mubr.bf16.gmra.mrb[0].mxu0 %v489
        %v528 = vpop.f32.mrb[0].mxu0
        %v529 = vadd.f32 0.0, %v528
        %v530 = vpop.f32.mrb[0].mxu0
        %v531 = vpop.f32.mrb[0].mxu0
        %v532 = vpop.f32.mrb[0].mxu0
        %533 = vdwg.mxu0
        %v535 = vsel %vm395, %v386, 0
        %v538 = vsel %vm395, %v390, 0
        %540 = vmatprep.subr.bf16.mxu0 0
        %541 = vmatpush1.bf16.xpose.msra.mxu0 %v538
        %542 = vmatprep.subr.bf16.mxu0 0
        %543 = vmatpush1.bf16.xpose.msra.mxu0 0
        %544 = vmatprep.subr.bf16.mxu0 0
        %545 = vmatpush1.bf16.xpose.msra.mxu0 0
        %546 = vmatprep.subr.bf16.mxu0 0
        %547 = vmatpush1.bf16.xpose.msra.mxu0 0
        %548 = vmatprep.subr.bf16.mxu0 0
        %549 = vmatpush1.bf16.xpose.msra.mxu0 0
        %550 = vmatprep.subr.bf16.mxu0 0
        %551 = vmatpush1.bf16.xpose.msra.mxu0 0
        %552 = vmatprep.subr.bf16.mxu0 0
        %553 = vmatpush1.bf16.xpose.msra.mxu0 0
        %554 = vmatprep.subr.bf16.mxu0 0
        %555 = vmatpush1.bf16.xpose.msra.mxu0 0
        %556 = vmatprep.subr.bf16.mxu0 0
        %557 = vmatpush1.bf16.xpose.msra.mxu0 0
        %558 = vmatprep.subr.bf16.mxu0 0
        %559 = vmatpush1.bf16.xpose.msra.mxu0 0
        %560 = vmatprep.subr.bf16.mxu0 0
        %561 = vmatpush1.bf16.xpose.msra.mxu0 0
        %562 = vmatprep.subr.bf16.mxu0 0
        %563 = vmatpush1.bf16.xpose.msra.mxu0 0
        %564 = vmatprep.subr.bf16.mxu0 0
        %565 = vmatpush1.bf16.xpose.msra.mxu0 0
        %566 = vmatprep.subr.bf16.mxu0 0
        %567 = vmatpush1.bf16.xpose.msra.mxu0 0
        %568 = vmatprep.subr.bf16.mxu0 0
        %569 = vmatpush1.bf16.xpose.msra.mxu0 0
        %570 = vmatprep.subr.bf16.mxu0 0
        %571 = vmatpush1.bf16.xpose.msra.mxu0 0
        %572 = vmatprep.mubr.bf16.mxu0 0
        %573 = vmatmul.mubr.bf16.gmra.mrb[0].mxu0 %v535
        %v574 = vpop.f32.mrb[0].mxu0
        %v575 = vadd.f32 0.0, %v574
        %v576 = vpop.f32.mrb[0].mxu0
        %v577 = vpop.f32.mrb[0].mxu0
        %v578 = vpop.f32.mrb[0].mxu0
        %579 = vdwg.mxu0
        %v580 = vmul.f32 %v437, 0.35355338
        %v581 = vmul.f32 %v483, 0.35355338
        %v582 = vmul.f32 %v529, 0.35355338
        %v583 = vmul.f32 %v575, 0.35355338
        %v584 = vlaneseq
        %v585 = vshrl.u32 %v584, 7
        %v586 = vstv %s382
        %v587 = vadd.s32 %v586, %v585
        %v588 = vlaneseq
        %v589 = vand.u32 %v588, 127
        %vm590 = vcmp.ge.s32.totalorder %v587, %v589
        %v591 = vsel %vm590, 1, 0
        %vm592 = vcmp.eq.s32.totalorder %v591, 1
        %v593 = vsel %vm592, %v580, -1e+30
        %v594 = vsel %vm592, %v581, -1e+30
        %v595 = vsel %vm592, %v582, -1e+30
        %v596 = vsel %vm592, %v583, -1e+30
        %v597 = vsel %vm395, %v593, -inf
        %598 = vmax.xlane.f32.xlu0 %v597
        %v599 = vpop.xlane.xlu0 %598
        %v600 = vsel %vm395, %v594, -inf
        %601 = vmax.xlane.f32.xlu0 %v600
        %v602 = vpop.xlane.xlu0 %601
        %v603 = vsel %vm395, %v595, -inf
        %604 = vmax.xlane.f32.xlu0 %v603
        %v605 = vpop.xlane.xlu0 %604
        %v606 = vsel %vm395, %v596, -inf
        %607 = vmax.xlane.f32.xlu0 %v606
        %v608 = vpop.xlane.xlu0 %607
        %v609 = vsub.f32 %v593, %v599
        %v610 = vsub.f32 %v594, %v602
        %v611 = vsub.f32 %v595, %v605
        %v612 = vsub.f32 %v596, %v608
        %v613 = vmul.f32 %v609, 1.442695
        %v614 = vpow.pop %v613
        %v615 = vmul.f32 %v610, 1.442695
        %v616 = vpow.pop %v615
        %v617 = vmul.f32 %v611, 1.442695
        %v618 = vpow.pop %v617
        %v619 = vmul.f32 %v612, 1.442695
        %v620 = vpow.pop %v619
        %v621 = vsel %vm395, %v614, 0.0
        %622 = vadd.xlane.f32.xlu0 %v621
        %v623 = vpop.xlane.xlu0 %622
        %v624 = vsel %vm395, %v616, 0.0
        %625 = vadd.xlane.f32.xlu0 %v624
        %v626 = vpop.xlane.xlu0 %625
        %v627 = vsel %vm395, %v618, 0.0
        %628 = vadd.xlane.f32.xlu0 %v627
        %v629 = vpop.xlane.xlu0 %628
        %v630 = vsel %vm395, %v620, 0.0
        %631 = vadd.xlane.f32.xlu0 %v630
        %v632 = vpop.xlane.xlu0 %631
        %v633 = vrcp.pop %v623
        %v634 = vrcp.pop %v626
        %v635 = vrcp.pop %v629
        %v636 = vrcp.pop %v632
        %v637 = vmul.f32 %v614, %v633
        %v638 = vmul.f32 %v616, %v634
        %v639 = vmul.f32 %v618, %v635
        %v640 = vmul.f32 %v620, %v636
        %v641 = vpack.c.bf16 %v637, %v637
        %v642 = vpack.c.bf16 %v638, %v638
        %v643 = vpack.c.bf16 %v639, %v639
        %v644 = vpack.c.bf16 %v640, %v640
        %v646 = vsel %vm395, %v641, 0
        %vm648 = vcmask 1043456
        %v650 = vsel %vm648, %v391, 0
        %652 = vmatprep.subr.bf16.mxu0 0
        %653 = vmatpush1.bf16.msra.mxu0 %v650
        %654 = vmatprep.subr.bf16.mxu0 0
        %655 = vmatpush1.bf16.msra.mxu0 0
        %656 = vmatprep.subr.bf16.mxu0 0
        %657 = vmatpush1.bf16.msra.mxu0 0
        %658 = vmatprep.subr.bf16.mxu0 0
        %659 = vmatpush1.bf16.msra.mxu0 0
        %660 = vmatprep.subr.bf16.mxu0 0
        %661 = vmatpush1.bf16.msra.mxu0 0
        %662 = vmatprep.subr.bf16.mxu0 0
        %663 = vmatpush1.bf16.msra.mxu0 0
        %664 = vmatprep.subr.bf16.mxu0 0
        %665 = vmatpush1.bf16.msra.mxu0 0
        %666 = vmatprep.subr.bf16.mxu0 0
        %667 = vmatpush1.bf16.msra.mxu0 0
        %668 = vmatprep.subr.bf16.mxu0 0
        %669 = vmatpush1.bf16.msra.mxu0 0
        %670 = vmatprep.subr.bf16.mxu0 0
        %671 = vmatpush1.bf16.msra.mxu0 0
        %672 = vmatprep.subr.bf16.mxu0 0
        %673 = vmatpush1.bf16.msra.mxu0 0
        %674 = vmatprep.subr.bf16.mxu0 0
        %675 = vmatpush1.bf16.msra.mxu0 0
        %676 = vmatprep.subr.bf16.mxu0 0
        %677 = vmatpush1.bf16.msra.mxu0 0
        %678 = vmatprep.subr.bf16.mxu0 0
        %679 = vmatpush1.bf16.msra.mxu0 0
        %680 = vmatprep.subr.bf16.mxu0 0
        %681 = vmatpush1.bf16.msra.mxu0 0
        %682 = vmatprep.subr.bf16.mxu0 0
        %683 = vmatpush1.bf16.msra.mxu0 0
        %684 = vmatprep.mubr.bf16.mxu0 0
        %685 = vmatmul.mubr.bf16.gmra.mrb[0].mxu0 %v646
        %v686 = vpop.f32.mrb[0].mxu0
        %v687 = vadd.f32 0.0, %v686
        %v688 = vpop.f32.mrb[0].mxu0
        %v689 = vpop.f32.mrb[0].mxu0
        %v690 = vpop.f32.mrb[0].mxu0
        %691 = vdwg.mxu0
        %v693 = vsel %vm395, %v642, 0
        %v696 = vsel %vm648, %v392, 0
        %698 = vmatprep.subr.bf16.mxu0 0
        %699 = vmatpush1.bf16.msra.mxu0 %v696
        %700 = vmatprep.subr.bf16.mxu0 0
        %701 = vmatpush1.bf16.msra.mxu0 0
        %702 = vmatprep.subr.bf16.mxu0 0
        %703 = vmatpush1.bf16.msra.mxu0 0
        %704 = vmatprep.subr.bf16.mxu0 0
        %705 = vmatpush1.bf16.msra.mxu0 0
        %706 = vmatprep.subr.bf16.mxu0 0
        %707 = vmatpush1.bf16.msra.mxu0 0
        %708 = vmatprep.subr.bf16.mxu0 0
        %709 = vmatpush1.bf16.msra.mxu0 0
        %710 = vmatprep.subr.bf16.mxu0 0
        %711 = vmatpush1.bf16.msra.mxu0 0
        %712 = vmatprep.subr.bf16.mxu0 0
        %713 = vmatpush1.bf16.msra.mxu0 0
        %714 = vmatprep.subr.bf16.mxu0 0
        %715 = vmatpush1.bf16.msra.mxu0 0
        %716 = vmatprep.subr.bf16.mxu0 0
        %717 = vmatpush1.bf16.msra.mxu0 0
        %718 = vmatprep.subr.bf16.mxu0 0
        %719 = vmatpush1.bf16.msra.mxu0 0
        %720 = vmatprep.subr.bf16.mxu0 0
        %721 = vmatpush1.bf16.msra.mxu0 0
        %722 = vmatprep.subr.bf16.mxu0 0
        %723 = vmatpush1.bf16.msra.mxu0 0
        %724 = vmatprep.subr.bf16.mxu0 0
        %725 = vmatpush1.bf16.msra.mxu0 0
        %726 = vmatprep.subr.bf16.mxu0 0
        %727 = vmatpush1.bf16.msra.mxu0 0
        %728 = vmatprep.subr.bf16.mxu0 0
        %729 = vmatpush1.bf16.msra.mxu0 0
        %730 = vmatprep.mubr.bf16.mxu0 0
        %731 = vmatmul.mubr.bf16.gmra.mrb[0].mxu0 %v693
        %v732 = vpop.f32.mrb[0].mxu0
        %v733 = vadd.f32 0.0, %v732
        %v734 = vpop.f32.mrb[0].mxu0
        %v735 = vpop.f32.mrb[0].mxu0
        %v736 = vpop.f32.mrb[0].mxu0
        %737 = vdwg.mxu0
        %v739 = vsel %vm395, %v643, 0
        %v742 = vsel %vm648, %v393, 0
        %744 = vmatprep.subr.bf16.mxu0 0
        %745 = vmatpush1.bf16.msra.mxu0 %v742
        %746 = vmatprep.subr.bf16.mxu0 0
        %747 = vmatpush1.bf16.msra.mxu0 0
        %748 = vmatprep.subr.bf16.mxu0 0
        %749 = vmatpush1.bf16.msra.mxu0 0
        %750 = vmatprep.subr.bf16.mxu0 0
        %751 = vmatpush1.bf16.msra.mxu0 0
        %752 = vmatprep.subr.bf16.mxu0 0
        %753 = vmatpush1.bf16.msra.mxu0 0
        %754 = vmatprep.subr.bf16.mxu0 0
        %755 = vmatpush1.bf16.msra.mxu0 0
        %756 = vmatprep.subr.bf16.mxu0 0
        %757 = vmatpush1.bf16.msra.mxu0 0
        %758 = vmatprep.subr.bf16.mxu0 0
        %759 = vmatpush1.bf16.msra.mxu0 0
        %760 = vmatprep.subr.bf16.mxu0 0
        %761 = vmatpush1.bf16.msra.mxu0 0
        %762 = vmatprep.subr.bf16.mxu0 0
        %763 = vmatpush1.bf16.msra.mxu0 0
        %764 = vmatprep.subr.bf16.mxu0 0
        %765 = vmatpush1.bf16.msra.mxu0 0
        %766 = vmatprep.subr.bf16.mxu0 0
        %767 = vmatpush1.bf16.msra.mxu0 0
        %768 = vmatprep.subr.bf16.mxu0 0
        %769 = vmatpush1.bf16.msra.mxu0 0
        %770 = vmatprep.subr.bf16.mxu0 0
        %771 = vmatpush1.bf16.msra.mxu0 0
        %772 = vmatprep.subr.bf16.mxu0 0
        %773 = vmatpush1.bf16.msra.mxu0 0
        %774 = vmatprep.subr.bf16.mxu0 0
        %775 = vmatpush1.bf16.msra.mxu0 0
        %776 = vmatprep.mubr.bf16.mxu0 0
        %777 = vmatmul.mubr.bf16.gmra.mrb[0].mxu0 %v739
        %v778 = vpop.f32.mrb[0].mxu0
        %v779 = vadd.f32 0.0, %v778
        %v780 = vpop.f32.mrb[0].mxu0
        %v781 = vpop.f32.mrb[0].mxu0
        %v782 = vpop.f32.mrb[0].mxu0
        %783 = vdwg.mxu0
        %v785 = vsel %vm395, %v644, 0
        %v788 = vsel %vm648, %v394, 0
        %790 = vmatprep.subr.bf16.mxu0 0
        %791 = vmatpush1.bf16.msra.mxu0 %v788
        %792 = vmatprep.subr.bf16.mxu0 0
        %793 = vmatpush1.bf16.msra.mxu0 0
        %794 = vmatprep.subr.bf16.mxu0 0
        %795 = vmatpush1.bf16.msra.mxu0 0
        %796 = vmatprep.subr.bf16.mxu0 0
        %797 = vmatpush1.bf16.msra.mxu0 0
        %798 = vmatprep.subr.bf16.mxu0 0
        %799 = vmatpush1.bf16.msra.mxu0 0
        %800 = vmatprep.subr.bf16.mxu0 0
        %801 = vmatpush1.bf16.msra.mxu0 0
        %802 = vmatprep.subr.bf16.mxu0 0
        %803 = vmatpush1.bf16.msra.mxu0 0
        %804 = vmatprep.subr.bf16.mxu0 0
        %805 = vmatpush1.bf16.msra.mxu0 0
        %806 = vmatprep.subr.bf16.mxu0 0
        %807 = vmatpush1.bf16.msra.mxu0 0
        %808 = vmatprep.subr.bf16.mxu0 0
        %809 = vmatpush1.bf16.msra.mxu0 0
        %810 = vmatprep.subr.bf16.mxu0 0
        %811 = vmatpush1.bf16.msra.mxu0 0
        %812 = vmatprep.subr.bf16.mxu0 0
        %813 = vmatpush1.bf16.msra.mxu0 0
        %814 = vmatprep.subr.bf16.mxu0 0
        %815 = vmatpush1.bf16.msra.mxu0 0
        %816 = vmatprep.subr.bf16.mxu0 0
        %817 = vmatpush1.bf16.msra.mxu0 0
        %818 = vmatprep.subr.bf16.mxu0 0
        %819 = vmatpush1.bf16.msra.mxu0 0
        %820 = vmatprep.subr.bf16.mxu0 0
        %821 = vmatpush1.bf16.msra.mxu0 0
        %822 = vmatprep.mubr.bf16.mxu0 0
        %823 = vmatmul.mubr.bf16.gmra.mrb[0].mxu0 %v785
        %v824 = vpop.f32.mrb[0].mxu0
        %v825 = vadd.f32 0.0, %v824
        %v826 = vpop.f32.mrb[0].mxu0
        %v827 = vpop.f32.mrb[0].mxu0
        %v828 = vpop.f32.mrb[0].mxu0
        %829 = vdwg.mxu0
        %v830 = vpack.c.bf16 %v687, %v687
        %v831 = vpack.c.bf16 %v733, %v733
        %v832 = vpack.c.bf16 %v779, %v779
        %v833 = vpack.c.bf16 %v825, %v825
        %v834 = vld [vmem:[#allocation10] sm:$0xf]
        %v835 = vld [vmem:[#allocation10 + $0x4] sm:$0xf]
        %v836 = vld [vmem:[#allocation10 + $0x8] sm:$0xf]
        %v837 = vld [vmem:[#allocation10 + $0xc] sm:$0xf]
        %v839 = vsel %vm395, %v830, 0
        %v842 = vsel %vm648, %v834, 0
        %844 = vmatprep.subr.bf16.mxu0 0
        %845 = vmatpush1.bf16.msra.mxu0 %v842
        %846 = vmatprep.subr.bf16.mxu0 0
        %847 = vmatpush1.bf16.msra.mxu0 0
        %848 = vmatprep.subr.bf16.mxu0 0
        %849 = vmatpush1.bf16.msra.mxu0 0
        %850 = vmatprep.subr.bf16.mxu0 0
        %851 = vmatpush1.bf16.msra.mxu0 0
        %852 = vmatprep.subr.bf16.mxu0 0
        %853 = vmatpush1.bf16.msra.mxu0 0
        %854 = vmatprep.subr.bf16.mxu0 0
        %855 = vmatpush1.bf16.msra.mxu0 0
        %856 = vmatprep.subr.bf16.mxu0 0
        %857 = vmatpush1.bf16.msra.mxu0 0
        %858 = vmatprep.subr.bf16.mxu0 0
        %859 = vmatpush1.bf16.msra.mxu0 0
        %860 = vmatprep.subr.bf16.mxu0 0
        %861 = vmatpush1.bf16.msra.mxu0 0
        %862 = vmatprep.subr.bf16.mxu0 0
        %863 = vmatpush1.bf16.msra.mxu0 0
        %864 = vmatprep.subr.bf16.mxu0 0
        %865 = vmatpush1.bf16.msra.mxu0 0
        %866 = vmatprep.subr.bf16.mxu0 0
        %867 = vmatpush1.bf16.msra.mxu0 0
        %868 = vmatprep.subr.bf16.mxu0 0
        %869 = vmatpush1.bf16.msra.mxu0 0
        %870 = vmatprep.subr.bf16.mxu0 0
        %871 = vmatpush1.bf16.msra.mxu0 0
        %872 = vmatprep.subr.bf16.mxu0 0
        %873 = vmatpush1.bf16.msra.mxu0 0
        %874 = vmatprep.subr.bf16.mxu0 0
        %875 = vmatpush1.bf16.msra.mxu0 0
        %876 = vmatprep.mubr.bf16.mxu0 0
        %877 = vmatmul.mubr.bf16.gmra.mrb[0].mxu0 %v839
        %v878 = vpop.f32.mrb[0].mxu0
        %v879 = vadd.f32 0.0, %v878
        %v880 = vpop.f32.mrb[0].mxu0
        %v881 = vpop.f32.mrb[0].mxu0
        %v882 = vpop.f32.mrb[0].mxu0
        %883 = vdwg.mxu0
        %v885 = vsel %vm395, %v831, 0
        %v888 = vsel %vm648, %v835, 0
        %890 = vmatprep.subr.bf16.mxu0 0
        %891 = vmatpush1.bf16.msra.mxu0 %v888
        %892 = vmatprep.subr.bf16.mxu0 0
        %893 = vmatpush1.bf16.msra.mxu0 0
        %894 = vmatprep.subr.bf16.mxu0 0
        %895 = vmatpush1.bf16.msra.mxu0 0
        %896 = vmatprep.subr.bf16.mxu0 0
        %897 = vmatpush1.bf16.msra.mxu0 0
        %898 = vmatprep.subr.bf16.mxu0 0
        %899 = vmatpush1.bf16.msra.mxu0 0
        %900 = vmatprep.subr.bf16.mxu0 0
        %901 = vmatpush1.bf16.msra.mxu0 0
        %902 = vmatprep.subr.bf16.mxu0 0
        %903 = vmatpush1.bf16.msra.mxu0 0
        %904 = vmatprep.subr.bf16.mxu0 0
        %905 = vmatpush1.bf16.msra.mxu0 0
        %906 = vmatprep.subr.bf16.mxu0 0
        %907 = vmatpush1.bf16.msra.mxu0 0
        %908 = vmatprep.subr.bf16.mxu0 0
        %909 = vmatpush1.bf16.msra.mxu0 0
        %910 = vmatprep.subr.bf16.mxu0 0
        %911 = vmatpush1.bf16.msra.mxu0 0
        %912 = vmatprep.subr.bf16.mxu0 0
        %913 = vmatpush1.bf16.msra.mxu0 0
        %914 = vmatprep.subr.bf16.mxu0 0
        %915 = vmatpush1.bf16.msra.mxu0 0
        %916 = vmatprep.subr.bf16.mxu0 0
        %917 = vmatpush1.bf16.msra.mxu0 0
        %918 = vmatprep.subr.bf16.mxu0 0
        %919 = vmatpush1.bf16.msra.mxu0 0
        %920 = vmatprep.subr.bf16.mxu0 0
        %921 = vmatpush1.bf16.msra.mxu0 0
        %922 = vmatprep.mubr.bf16.mxu0 0
        %923 = vmatmul.mubr.bf16.gmra.mrb[0].mxu0 %v885
        %v924 = vpop.f32.mrb[0].mxu0
        %v925 = vadd.f32 0.0, %v924
        %v926 = vpop.f32.mrb[0].mxu0
        %v927 = vpop.f32.mrb[0].mxu0
        %v928 = vpop.f32.mrb[0].mxu0
        %929 = vdwg.mxu0
        %v931 = vsel %vm395, %v832, 0
        %v934 = vsel %vm648, %v836, 0
        %936 = vmatprep.subr.bf16.mxu0 0
        %937 = vmatpush1.bf16.msra.mxu0 %v934
        %938 = vmatprep.subr.bf16.mxu0 0
        %939 = vmatpush1.bf16.msra.mxu0 0
        %940 = vmatprep.subr.bf16.mxu0 0
        %941 = vmatpush1.bf16.msra.mxu0 0
        %942 = vmatprep.subr.bf16.mxu0 0
        %943 = vmatpush1.bf16.msra.mxu0 0
        %944 = vmatprep.subr.bf16.mxu0 0
        %945 = vmatpush1.bf16.msra.mxu0 0
        %946 = vmatprep.subr.bf16.mxu0 0
        %947 = vmatpush1.bf16.msra.mxu0 0
        %948 = vmatprep.subr.bf16.mxu0 0
        %949 = vmatpush1.bf16.msra.mxu0 0
        %950 = vmatprep.subr.bf16.mxu0 0
        %951 = vmatpush1.bf16.msra.mxu0 0
        %952 = vmatprep.subr.bf16.mxu0 0
        %953 = vmatpush1.bf16.msra.mxu0 0
        %954 = vmatprep.subr.bf16.mxu0 0
        %955 = vmatpush1.bf16.msra.mxu0 0
        %956 = vmatprep.subr.bf16.mxu0 0
        %957 = vmatpush1.bf16.msra.mxu0 0
        %958 = vmatprep.subr.bf16.mxu0 0
        %959 = vmatpush1.bf16.msra.mxu0 0
        %960 = vmatprep.subr.bf16.mxu0 0
        %961 = vmatpush1.bf16.msra.mxu0 0
        %962 = vmatprep.subr.bf16.mxu0 0
        %963 = vmatpush1.bf16.msra.mxu0 0
        %964 = vmatprep.subr.bf16.mxu0 0
        %965 = vmatpush1.bf16.msra.mxu0 0
        %966 = vmatprep.subr.bf16.mxu0 0
        %967 = vmatpush1.bf16.msra.mxu0 0
        %968 = vmatprep.mubr.bf16.mxu0 0
        %969 = vmatmul.mubr.bf16.gmra.mrb[0].mxu0 %v931
        %v970 = vpop.f32.mrb[0].mxu0
        %v971 = vadd.f32 0.0, %v970
        %v972 = vpop.f32.mrb[0].mxu0
        %v973 = vpop.f32.mrb[0].mxu0
        %v974 = vpop.f32.mrb[0].mxu0
        %975 = vdwg.mxu0
        %v977 = vsel %vm395, %v833, 0
        %v980 = vsel %vm648, %v837, 0
        %982 = vmatprep.subr.bf16.mxu0 0
        %983 = vmatpush1.bf16.msra.mxu0 %v980
        %984 = vmatprep.subr.bf16.mxu0 0
        %985 = vmatpush1.bf16.msra.mxu0 0
        %986 = vmatprep.subr.bf16.mxu0 0
        %987 = vmatpush1.bf16.msra.mxu0 0
        %988 = vmatprep.subr.bf16.mxu0 0
        %989 = vmatpush1.bf16.msra.mxu0 0
        %990 = vmatprep.subr.bf16.mxu0 0
        %991 = vmatpush1.bf16.msra.mxu0 0
        %992 = vmatprep.subr.bf16.mxu0 0
        %993 = vmatpush1.bf16.msra.mxu0 0
        %994 = vmatprep.subr.bf16.mxu0 0
        %995 = vmatpush1.bf16.msra.mxu0 0
        %996 = vmatprep.subr.bf16.mxu0 0
        %997 = vmatpush1.bf16.msra.mxu0 0
        %998 = vmatprep.subr.bf16.mxu0 0
        %999 = vmatpush1.bf16.msra.mxu0 0
        %1000 = vmatprep.subr.bf16.mxu0 0
        %1001 = vmatpush1.bf16.msra.mxu0 0
        %1002 = vmatprep.subr.bf16.mxu0 0
        %1003 = vmatpush1.bf16.msra.mxu0 0
        %1004 = vmatprep.subr.bf16.mxu0 0
        %1005 = vmatpush1.bf16.msra.mxu0 0
        %1006 = vmatprep.subr.bf16.mxu0 0
        %1007 = vmatpush1.bf16.msra.mxu0 0
        %1008 = vmatprep.subr.bf16.mxu0 0
        %1009 = vmatpush1.bf16.msra.mxu0 0
        %1010 = vmatprep.subr.bf16.mxu0 0
        %1011 = vmatpush1.bf16.msra.mxu0 0
        %1012 = vmatprep.subr.bf16.mxu0 0
        %1013 = vmatpush1.bf16.msra.mxu0 0
        %1014 = vmatprep.mubr.bf16.mxu0 0
        %1015 = vmatmul.mubr.bf16.gmra.mrb[0].mxu0 %v977
        %v1016 = vpop.f32.mrb[0].mxu0
        %v1017 = vadd.f32 0.0, %v1016
        %v1018 = vpop.f32.mrb[0].mxu0
        %v1019 = vpop.f32.mrb[0].mxu0
        %v1020 = vpop.f32.mrb[0].mxu0
        %1021 = vdwg.mxu0
        %vm1022 = vcmask 261120
        %v1023 = vsel %vm1022, %v879, 0.0
        %v1024 = vsel %vm1022, %v925, 0.0
        %v1025 = vadd.f32 %v1023, %v1024
        %v1026 = vsel %vm1022, %v971, 0.0
        %v1027 = vadd.f32 %v1025, %v1026
        %v1028 = vsel %vm1022, %v1017, 0.0
        %v1029 = vadd.f32 %v1027, %v1028
        %v1030 = vld [vmem:[%s3] sm:$0x1]
        %v1032 = vlaneseq
        %v1033 = vshrl.u32 %v1032, 7
        %v1034 = vsub.s32 0, %v1033
        %v1035 = vrot.slane %v1030, %v1034
        %v1037 = vadd.f32 %v1029, %v1035
        %1038 = vst.msk [vmem:[%s255] sm:$0xff] %vm1022, %v1037
        %s1039 = sand.u32 %s133, 1
        %s1040 = scalar_lea.sflag [#allocation7], %s1039
        %s1041 = sand.u32 %s133, 1
        %s1042 = smul.addr %s1041, 8
        %s1043 = scalar_lea.vmem [#allocation11], %s1042
        // Predicated region
        $region53: #{tpu_custom_call.1} parent=35 // pred_check
          %p1044 = pneg %p143
        $region54: #{tpu_custom_call.1} parent=35 // pred_check_branch
          %1046 = sbr.rel (%p1044) target = $region56
        $region55: #{tpu_custom_call.1} parent=35 // pred_region
          %s1048 = ssub.s32 128, 128
          %1049 = vsyncadd %s1040, %s1048
          %s1050 = sadd.s32 %s27, %s26
          %s1051 = smul.addr %s1050, 128
          %s1052 = scalar_lea.hbm %s4, %s1051
          %s1054 = sshll.u32 %s1043, 4
          %s1055 = int_to_ptr.vmem [resolvable:$true] %s1054
          %1057 = dma.vmem_to_hbm [thread:$0]  %s1055, 128, %s1052, %s1040
        $region56: #{tpu_custom_call.1} parent=35 // pred_fallthru
          _
      $region36: #{tpu_custom_call.1} parent=5 // pred_fallthru
        _
      %p1058 = scmp.le.s32.totalorder 2, %s17
      // Predicated region
      $region57: #{tpu_custom_call.1} parent=5 // pred_check
        %p1059 = pneg %p1058
      $region58: #{tpu_custom_call.1} parent=5 // pred_check_branch
        %1061 = sbr.rel (%p1059) target = $region60
      $region59: #{tpu_custom_call.1} parent=5 // pred_region
        %s1062 = ssub.s32 %s17, 2
        // Predicated region
        $region61: #{tpu_custom_call.1} parent=59 // pred_check
          %p1063 = pneg %p149
        $region62: #{tpu_custom_call.1} parent=59 // pred_check_branch
          %1065 = sbr.rel (%p1063) target = $region64
        $region63: #{tpu_custom_call.1} parent=59 // pred_region
          %s1066 = sand.u32 %s134, 1
          %s1067 = scalar_lea.sflag [#allocation7], %s1066
          %s1068 = sand.u32 %s134, 1
          %s1069 = smul.addr %s1068, 8
          %s1070 = scalar_lea.vmem [#allocation11], %s1069
          %1071 = dma.done %s1067, 128
        $region64: #{tpu_custom_call.1} parent=59 // pred_fallthru
          _
      $region60: #{tpu_custom_call.1} parent=5 // pred_fallthru
        _
    $region6: #{tpu_custom_call.1} parent=1 // loop_footer
      %s21 = sadd.s32 1, %s17
    $region7: #{tpu_custom_call.1} parent=1 // loop_footer_branch
      %16 = sbr.rel target = $region3
    $region8: #{tpu_custom_call.1} parent=1 // loop_exit
      _
    %1072 = vsyncpa [#allocation6], 1
    %s1073 = scalar_lea.sflag [#allocation6], 1
    %1074 = vsyncpa %s1073, 1
    %1075 = vsyncpa [#allocation9], 1
    %1076 = vsyncpa [#allocation7], 1
    %s1077 = scalar_lea.sflag [#allocation7], 1
    %1078 = vsyncpa %s1077, 1

</llo_original>
